<compile_context>
chip_gen: v7x
topology: tpu7x:2x2x1
jax: 0.10.0
libtpu: 0.0.40
codegen_flags: <defaults>
</compile_context>

<pallas_src>
import functools

import jax
import jax.numpy as jnp
from jax.experimental import pallas as pl
from jax.experimental.pallas import tpu as pltpu


# ---------------------------------------------------------------------------
# Shared in-kernel compute: depthwise conv (rolls + halo masks) + pointwise MXU
# ---------------------------------------------------------------------------
def _dw_pw(x, dw, pw, *, L, K, D, PAD):
    """x: (nb, C_in, L) f32; dw: (C_in, K) f32; pw: (C_out, C_in) f32.

    Returns a list of nb (C_out, L) f32 tiles (one per batch element in the block).
    """
    pos = jax.lax.broadcasted_iota(jnp.int32, (1, 1, L), 2)   # time index within L

    acc = None
    for j in range(K):                       # static unroll over taps
        off = j * D - PAD                    # source offset relative to output pos
        if off == 0:
            term = x
        else:
            rolled = pltpu.roll(x, shift=(-off) % L, axis=2)  # lane (XLU) rotation
            if off < 0:
                term = jnp.where(pos >= -off, rolled, 0.0)    # zero-pad left halo
            else:
                term = jnp.where(pos < L - off, rolled, 0.0)  # zero-pad right halo
        term = dw[:, j:j + 1] * term         # (C_in,1) broadcasts over (nb,C_in,L)
        acc = term if acc is None else acc + term

    nb = x.shape[0]
    # Pointwise conv1d: one lane-dense MXU matmul per batch element in the block.
    return [jnp.dot(pw, acc[b], preferred_element_type=jnp.float32) for b in range(nb)]


# ---------------------------------------------------------------------------
# Pass 1: per-grid-step partial BN statistics (parallel over batch blocks)
# ---------------------------------------------------------------------------
def _stats_kernel(x_ref, dw_ref, pw_ref, sum_ref, ssq_ref, *, L, K, D, PAD):
    x = x_ref[...].astype(jnp.float32)       # (nb, C_in, L)
    dw = dw_ref[...].astype(jnp.float32)     # (C_in, K)
    pw = pw_ref[...].astype(jnp.float32)     # (C_out, C_in)

    ys = _dw_pw(x, dw, pw, L=L, K=K, D=D, PAD=PAD)

    s = None
    q = None
    for y in ys:                             # y: (C_out, L)
        sy = jnp.sum(y, axis=1, keepdims=True)
        qy = jnp.sum(y * y, axis=1, keepdims=True)
        s = sy if s is None else s + sy
        q = qy if q is None else q + qy

    sum_ref[...] = s                         # (C_out, 1) partial sum for this step
    ssq_ref[...] = q                         # (C_out, 1) partial sum of squares


# ---------------------------------------------------------------------------
# Pass 2: recompute conv, fused BN-apply + SiLU, native (nb, C_out, L) store
# ---------------------------------------------------------------------------
def _apply_kernel(x_ref, dw_ref, pw_ref, scale_ref, shift_ref, out_ref,
                  *, L, K, D, PAD):
    x = x_ref[...].astype(jnp.float32)
    dw = dw_ref[...].astype(jnp.float32)
    pw = pw_ref[...].astype(jnp.float32)
    scale = scale_ref[...]                   # (C_out, 1)
    shift = shift_ref[...]                   # (C_out, 1)

    ys = _dw_pw(x, dw, pw, L=L, K=K, D=D, PAD=PAD)
    for b, y in enumerate(ys):
        z = y * scale + shift
        out_ref[b] = (z * jax.nn.sigmoid(z)).astype(out_ref.dtype)


# ---------------------------------------------------------------------------
# Wrapper
# ---------------------------------------------------------------------------
def _pick_batch_block(N, C_in, C_out, L, budget_bytes=6 * 1024 * 1024):
    """Largest divisor of N whose block (x + out + f32 temps) fits the budget,
    keeping >=2 grid steps when possible (v7x two-TC balance)."""
    per_batch = 3 * (C_in + C_out) * L * 4
    cap = max(1, budget_bytes // per_batch)
    if N >= 2:
        cap = min(cap, N // 2)
    best = 1
    for nb in range(1, N + 1):
        if N % nb == 0 and nb <= cap:
            best = nb
    return best


def dsconv1d(x, dw, pw, gamma, beta, *, k=3, d=1, eps=1e-5):
    """x: (N, C_in, L); dw: (C_in, k); pw: (C_out, C_in); gamma/beta: (C_out,)."""
    N, C_in, L = x.shape
    C_out = pw.shape[0]
    # TODO(synk): even k changes the output length in the PyTorch module; only odd
    # k (the module's intended use) preserves L and is supported here.
    assert k % 2 == 1, "only odd kernel sizes preserve the sequence length"
    pad = (k - 1) // 2 * d

    nb = _pick_batch_block(N, C_in, C_out, L)
    n_steps = N // nb

    cparams = pltpu.CompilerParams(
        dimension_semantics=("parallel",),            # both passes shard across TCs
        vmem_limit_bytes=32 * 1024 * 1024)            # safe on v5e/v6e/v7x

    # ---- pass 1: partial batch statistics ---------------------------------
    kern1 = functools.partial(_stats_kernel, L=L, K=k, D=d, PAD=pad)
    sum_p, ssq_p = pl.pallas_call(
        kern1,
        out_shape=(jax.ShapeDtypeStruct((n_steps, C_out, 1), jnp.float32),
                   jax.ShapeDtypeStruct((n_steps, C_out, 1), jnp.float32)),
        grid=(n_steps,),
        in_specs=[
            pl.BlockSpec((nb, C_in, L), lambda i: (i, 0, 0)),
            pl.BlockSpec((C_in, k), lambda i: (0, 0)),
            pl.BlockSpec((C_out, C_in), lambda i: (0, 0)),
        ],
        out_specs=(
            pl.BlockSpec((None, C_out, 1), lambda i: (i, 0, 0)),
            pl.BlockSpec((None, C_out, 1), lambda i: (i, 0, 0)),
        ),
        compiler_params=cparams,
    )(x, dw, pw)

    # ---- tiny finalize in the wrapper (n_steps x C_out elements) ----------
    count = float(N * L)
    mean = jnp.sum(sum_p, axis=0) / count                       # (C_out, 1)
    var = jnp.sum(ssq_p, axis=0) / count - mean * mean          # biased (training BN)
    scale = gamma.reshape(C_out, 1).astype(jnp.float32) * jax.lax.rsqrt(var + eps)
    shift = beta.reshape(C_out, 1).astype(jnp.float32) - mean * scale

    # ---- pass 2: recompute conv, fused BN + SiLU, native-layout output ----
    kern2 = functools.partial(_apply_kernel, L=L, K=k, D=d, PAD=pad)
    out = pl.pallas_call(
        kern2,
        out_shape=jax.ShapeDtypeStruct((N, C_out, L), x.dtype),
        grid=(n_steps,),
        in_specs=[
            pl.BlockSpec((nb, C_in, L), lambda i: (i, 0, 0)),
            pl.BlockSpec((C_in, k), lambda i: (0, 0)),
            pl.BlockSpec((C_out, C_in), lambda i: (0, 0)),
            pl.BlockSpec((C_out, 1), lambda i: (0, 0)),
            pl.BlockSpec((C_out, 1), lambda i: (0, 0)),
        ],
        out_specs=pl.BlockSpec((nb, C_out, L), lambda i: (i, 0, 0)),
        compiler_params=cparams,
    )(x, dw, pw, scale, shift)

    return out


# ---------------------------------------------------------------------------
# Pure-JAX reference (training-mode BN, biased variance) and demo
# ---------------------------------------------------------------------------
def _reference(x, dw, pw, gamma, beta, *, k=3, d=1, eps=1e-5):
    N, C_in, L = x.shape
    pad = (k - 1) // 2 * d
    y = jax.lax.conv_general_dilated(
        x, dw.reshape(C_in, 1, k),
        window_strides=(1,), padding=[(pad, pad)],
        rhs_dilation=(d,), feature_group_count=C_in,
        dimension_numbers=('NCH', 'OIH', 'NCH'))
    y = jnp.einsum('oc,ncl->nol', pw, y)
    mean = jnp.mean(y, axis=(0, 2), keepdims=True)
    var = jnp.mean((y - mean) ** 2, axis=(0, 2), keepdims=True)
    y = (y - mean) / jnp.sqrt(var + eps)
    y = y * gamma[None, :, None] + beta[None, :, None]
    return y * jax.nn.sigmoid(y)


if __name__ == "__main__":
    N, C_in, C_out, L = 4, 8, 16, 256

    key = jax.random.PRNGKey(0)
    kx, kg, kb, k1, k2, k3, k4 = jax.random.split(key, 7)

    x = jax.random.normal(kx, (N, C_in, L), dtype=jnp.float32)
    gamma = jax.random.uniform(kg, (C_out,), jnp.float32, 0.5, 1.5)
    beta = jax.random.normal(kb, (C_out,), jnp.float32) * 0.1

    configs = [((3, 1), k1, k2), ((5, 2), k3, k4)]
    for (kw, dil), kdw, kpw in configs:
        dw = jax.random.uniform(kdw, (C_in, kw), jnp.float32, -1.0, 1.0) / jnp.sqrt(float(kw))
        pw = jax.random.uniform(kpw, (C_out, C_in), jnp.float32, -1.0, 1.0) / jnp.sqrt(float(C_in))

        out = dsconv1d(x, dw, pw, gamma, beta, k=kw, d=dil)
        jax.block_until_ready(out)

        ref = _reference(x, dw, pw, gamma, beta, k=kw, d=dil)
        assert out.shape == (N, C_out, L)
        assert jnp.allclose(out, ref, atol=2e-4, rtol=2e-4), f"mismatch (k={kw}, d={dil})"

    print("KERNEL_OK")
</pallas_src>

<mosaic_0001>
module attributes {stable_mosaic.version = 11 : i64} {
  func.func @_stats_kernel(%arg0: i32, %arg1: memref<2x8x256xf32, #tpu.memory_space<vmem>>, %arg2: memref<8x3xf32, #tpu.memory_space<vmem>>, %arg3: memref<16x8xf32, #tpu.memory_space<vmem>>, %arg4: memref<1x16x1xf32, #tpu.memory_space<vmem>>, %arg5: memref<1x16x1xf32, #tpu.memory_space<vmem>>) attributes {dimension_semantics = [#tpu.dimension_semantics<parallel>], iteration_bounds = array<i64: 2>, scalar_prefetch = 0 : i64, scratch_operands = 0 : i64, tpu.core_type = #tpu.core_type<tc>, window_params = [{transform_indices = @transform_0, window_bounds = array<i64: 2, 8, 256>}, {pipeline_mode = #tpu.pipeline_mode<synchronous>, transform_indices = @transform_1, window_bounds = array<i64: 8, 3>}, {pipeline_mode = #tpu.pipeline_mode<synchronous>, transform_indices = @transform_2, window_bounds = array<i64: 16, 8>}, {transform_indices = @transform_3, window_bounds = array<i64: 1, 16, 1>}, {transform_indices = @transform_4, window_bounds = array<i64: 1, 16, 1>}]} {
    %c0 = arith.constant 0 : index
    %c0_0 = arith.constant 0 : index
    %c0_1 = arith.constant 0 : index
    %0 = vector.load %arg1[%c0, %c0_0, %c0_1] : memref<2x8x256xf32, #tpu.memory_space<vmem>>, vector<2x8x256xf32>
    %c0_2 = arith.constant 0 : index
    %c0_3 = arith.constant 0 : index
    %1 = vector.load %arg2[%c0_2, %c0_3] : memref<8x3xf32, #tpu.memory_space<vmem>>, vector<8x3xf32>
    %c0_4 = arith.constant 0 : index
    %c0_5 = arith.constant 0 : index
    %2 = vector.load %arg3[%c0_4, %c0_5] : memref<16x8xf32, #tpu.memory_space<vmem>>, vector<16x8xf32>
    %3 = tpu.iota {dimensions = array<i32: 2>} : vector<1x1x256xi32>
    %c1_i32 = arith.constant 1 : i32
    %4 = tpu.dynamic_rotate %0 by %c1_i32 dim 2 : vector<2x8x256xf32>, i32 -> vector<2x8x256xf32>
    %c1_i32_6 = arith.constant 1 : i32
    %5 = vector.broadcast %c1_i32_6 : i32 to vector<1x1x256xi32>
    %6 = arith.cmpi sge, %3, %5 : vector<1x1x256xi32>
    %cst = arith.constant 0.000000e+00 : f32
    %7 = vector.shape_cast %6 : vector<1x1x256xi1> to vector<1x1x256xi1>
    %8 = vector.broadcast %7 : vector<1x1x256xi1> to vector<2x8x256xi1>
    %9 = vector.broadcast %cst : f32 to vector<2x8x256xf32>
    %10 = arith.select %8, %4, %9 : vector<2x8x256xi1>, vector<2x8x256xf32>
    %11 = vector.extract_strided_slice %1 {offsets = [0, 0], sizes = [8, 1], strides = [1, 1]} : vector<8x3xf32> to vector<8x1xf32>
    %12 = vector.shape_cast %11 : vector<8x1xf32> to vector<1x8x1xf32>
    %13 = vector.broadcast %12 : vector<1x8x1xf32> to vector<2x8x256xf32>
    %14 = arith.mulf %13, %10 : vector<2x8x256xf32>
    %15 = vector.extract_strided_slice %1 {offsets = [0, 1], sizes = [8, 1], strides = [1, 1]} : vector<8x3xf32> to vector<8x1xf32>
    %16 = vector.shape_cast %15 : vector<8x1xf32> to vector<1x8x1xf32>
    %17 = vector.broadcast %16 : vector<1x8x1xf32> to vector<2x8x256xf32>
    %18 = arith.mulf %17, %0 : vector<2x8x256xf32>
    %19 = arith.addf %14, %18 : vector<2x8x256xf32>
    %c255_i32 = arith.constant 255 : i32
    %20 = tpu.dynamic_rotate %0 by %c255_i32 dim 2 : vector<2x8x256xf32>, i32 -> vector<2x8x256xf32>
    %c255_i32_7 = arith.constant 255 : i32
    %21 = vector.broadcast %c255_i32_7 : i32 to vector<1x1x256xi32>
    %22 = arith.cmpi slt, %3, %21 : vector<1x1x256xi32>
    %cst_8 = arith.constant 0.000000e+00 : f32
    %23 = vector.shape_cast %22 : vector<1x1x256xi1> to vector<1x1x256xi1>
    %24 = vector.broadcast %23 : vector<1x1x256xi1> to vector<2x8x256xi1>
    %25 = vector.broadcast %cst_8 : f32 to vector<2x8x256xf32>
    %26 = arith.select %24, %20, %25 : vector<2x8x256xi1>, vector<2x8x256xf32>
    %27 = vector.extract_strided_slice %1 {offsets = [0, 2], sizes = [8, 1], strides = [1, 1]} : vector<8x3xf32> to vector<8x1xf32>
    %28 = vector.shape_cast %27 : vector<8x1xf32> to vector<1x8x1xf32>
    %29 = vector.broadcast %28 : vector<1x8x1xf32> to vector<2x8x256xf32>
    %30 = arith.mulf %29, %26 : vector<2x8x256xf32>
    %31 = arith.addf %19, %30 : vector<2x8x256xf32>
    %32 = vector.extract_strided_slice %31 {offsets = [0, 0, 0], sizes = [1, 8, 256], strides = [1, 1, 1]} : vector<2x8x256xf32> to vector<1x8x256xf32>
    %33 = vector.shape_cast %32 : vector<1x8x256xf32> to vector<8x256xf32>
    %cst_9 = arith.constant dense<0.000000e+00> : vector<16x256xf32>
    %34 = tpu.matmul %2, %33, %cst_9 {dimension_numbers = #tpu.dot_dimension_numbers<[1], [0], [0], [1], [0, 0, 1, 1], [], []>} : vector<16x8xf32>, vector<8x256xf32>, vector<16x256xf32> -> vector<16x256xf32>
    %35 = vector.extract_strided_slice %31 {offsets = [1, 0, 0], sizes = [1, 8, 256], strides = [1, 1, 1]} : vector<2x8x256xf32> to vector<1x8x256xf32>
    %36 = vector.shape_cast %35 : vector<1x8x256xf32> to vector<8x256xf32>
    %cst_10 = arith.constant dense<0.000000e+00> : vector<16x256xf32>
    %37 = tpu.matmul %2, %36, %cst_10 {dimension_numbers = #tpu.dot_dimension_numbers<[1], [0], [0], [1], [0, 0, 1, 1], [], []>} : vector<16x8xf32>, vector<8x256xf32>, vector<16x256xf32> -> vector<16x256xf32>
    %cst_11 = arith.constant dense<0.000000e+00> : vector<16xf32>
    %38 = vector.multi_reduction <add>, %34, %cst_11 [1] : vector<16x256xf32> to vector<16xf32>
    %39 = vector.shape_cast %38 : vector<16xf32> to vector<16x1xf32>
    %40 = arith.mulf %34, %34 : vector<16x256xf32>
    %cst_12 = arith.constant dense<0.000000e+00> : vector<16xf32>
    %41 = vector.multi_reduction <add>, %40, %cst_12 [1] : vector<16x256xf32> to vector<16xf32>
    %42 = vector.shape_cast %41 : vector<16xf32> to vector<16x1xf32>
    %cst_13 = arith.constant dense<0.000000e+00> : vector<16xf32>
    %43 = vector.multi_reduction <add>, %37, %cst_13 [1] : vector<16x256xf32> to vector<16xf32>
    %44 = vector.shape_cast %43 : vector<16xf32> to vector<16x1xf32>
    %45 = arith.mulf %37, %37 : vector<16x256xf32>
    %cst_14 = arith.constant dense<0.000000e+00> : vector<16xf32>
    %46 = vector.multi_reduction <add>, %45, %cst_14 [1] : vector<16x256xf32> to vector<16xf32>
    %47 = vector.shape_cast %46 : vector<16xf32> to vector<16x1xf32>
    %48 = arith.addf %39, %44 : vector<16x1xf32>
    %49 = arith.addf %42, %47 : vector<16x1xf32>
    %c0_15 = arith.constant 0 : index
    %c0_16 = arith.constant 0 : index
    %c0_17 = arith.constant 0 : index
    %50 = vector.load %arg4[%c0_15, %c0_16, %c0_17] : memref<1x16x1xf32, #tpu.memory_space<vmem>>, vector<1x16x1xf32>
    %51 = vector.shape_cast %50 : vector<1x16x1xf32> to vector<16x1xf32>
    %52 = vector.shape_cast %48 : vector<16x1xf32> to vector<1x16x1xf32>
    tpu.vector_store %arg4[%c0_15, %c0_16, %c0_17], %52 {strides = array<i32>} : memref<1x16x1xf32, #tpu.memory_space<vmem>>, vector<1x16x1xf32>,
    %c0_18 = arith.constant 0 : index
    %c0_19 = arith.constant 0 : index
    %c0_20 = arith.constant 0 : index
    %53 = vector.load %arg5[%c0_18, %c0_19, %c0_20] : memref<1x16x1xf32, #tpu.memory_space<vmem>>, vector<1x16x1xf32>
    %54 = vector.shape_cast %53 : vector<1x16x1xf32> to vector<16x1xf32>
    %55 = vector.shape_cast %49 : vector<16x1xf32> to vector<1x16x1xf32>
    tpu.vector_store %arg5[%c0_18, %c0_19, %c0_20], %55 {strides = array<i32>} : memref<1x16x1xf32, #tpu.memory_space<vmem>>, vector<1x16x1xf32>,
    return
  }
  func.func @transform_0(%arg0: i32) -> (i32, i32, i32) {
    %c0_i32 = arith.constant 0 : i32
    %c0_i32_0 = arith.constant 0 : i32
    %c0_i32_1 = arith.constant 0 : i32
    return %arg0, %c0_i32, %c0_i32_0 : i32, i32, i32
  }
  func.func @transform_1(%arg0: i32) -> (i32, i32) {
    %c0_i32 = arith.constant 0 : i32
    %c0_i32_0 = arith.constant 0 : i32
    %c0_i32_1 = arith.constant 0 : i32
    return %c0_i32, %c0_i32_0 : i32, i32
  }
  func.func @transform_2(%arg0: i32) -> (i32, i32) {
    %c0_i32 = arith.constant 0 : i32
    %c0_i32_0 = arith.constant 0 : i32
    %c0_i32_1 = arith.constant 0 : i32
    return %c0_i32, %c0_i32_0 : i32, i32
  }
  func.func @transform_3(%arg0: i32) -> (i32, i32, i32) {
    %c0_i32 = arith.constant 0 : i32
    %c0_i32_0 = arith.constant 0 : i32
    %c0_i32_1 = arith.constant 0 : i32
    return %arg0, %c0_i32, %c0_i32_0 : i32, i32, i32
  }
  func.func @transform_4(%arg0: i32) -> (i32, i32, i32) {
    %c0_i32 = arith.constant 0 : i32
    %c0_i32_0 = arith.constant 0 : i32
    %c0_i32_1 = arith.constant 0 : i32
    return %arg0, %c0_i32, %c0_i32_0 : i32, i32, i32
  }
}

</mosaic_0001>

<llo_original>
// kernel: tpu_custom_call.1
$region0: #{tpu_custom_call.1}
  #allocation0 [shape = 'u32[]', space=smem, size = 0x4, offset = 0x4, fixed_abs, tag = 'smem constant byte address 0x4 - core index']
  #allocation1 [shape = 'u32[144,128]{1,0:T(1,128)}', space=vmem, size = 0x12000, scoped, tag = 'internal scratch']
  %s0 = inlined_call_operand.hbm [shape: f32[4,8,256], index: 0, kind: input, shape index: {}]
  %s1 = inlined_call_operand.vmem [shape: f32[8,3], index: 1, kind: input, shape index: {}]
  %s2 = inlined_call_operand.vmem [shape: f32[16,8], index: 2, kind: input, shape index: {}]
  %s3 = inlined_call_operand.vmem [shape: f32[2,16,1], index: 3, kind: output, shape index: {0}]
  %s4 = inlined_call_operand.vmem [shape: f32[2,16,1], index: 4, kind: output, shape index: {1}]
  %5 = xla_tuple %s3, %s4
  %s6 = sld [smem:[#allocation0]]
  $region57: #{tpu_custom_call.1} parent=0
    _
  %s8 = ssub.s32 1, %s6
  %s9 = scalar_select 0, %s8, %s6
  $region1: #{tpu_custom_call.1} parent=0
    #allocation2 [shape = 'u8[32768]{0}', space=vmem, size = 0x8000, scoped, tag = 'input window, operand 0']
    #allocation3 [shape = 's32[2]{0}', space=sflag, size = 0x8, scoped, tag = 'scoped memory for tpu_custom_call.1']
    %10 = vsyncpa [#allocation3], 0
    %s11 = scalar_lea.sflag [#allocation3], 1
    %12 = vsyncpa %s11, 0
    loop: start=0, step=1, limit=4
    $region2: #{tpu_custom_call.1} parent=1 // loop_pre_header
      _
    $region3: #{tpu_custom_call.1} parent=1 // loop_header
      %s14 = sphi 0, %s18
      %p15 = scmp.ge.s32.totalorder %s14, 4
      %s24 = sphi 0, %s26
      %s27 = sphi 0, %s24
      %s28 = sphi 0, %s27
      %s44 = sphi 0, %s28
      %s48 = sphi 0, %s48
      %s50 = sphi 0, %s48
      %s51 = sphi 0, %s50
      %s65 = sphi 0, %s51
      %s69 = sphi 0, %s69
      %s71 = sphi 0, %s69
      %s72 = sphi 0, %s71
      %s86 = sphi 0, %s72
      %s92 = sphi 0, %s94
      %s95 = sphi 0, %s92
      %s96 = sphi 0, %s95
      %s112 = sphi 0, %s96
      %s118 = sphi 0, %s120
      %s121 = sphi 0, %s118
      %s122 = sphi 0, %s121
      %s138 = sphi 0, %s122
    $region4: #{tpu_custom_call.1} parent=1 // loop_header_branch
      %17 = sbr.rel (%p15) target = $region8
    $region5: #{tpu_custom_call.1} parent=1 // loop_body
      %s19 = ssub.s32 %s14, 1
      %s20 = ssub.s32 %s14, 2
      %s21 = sadd.s32 %s14, 1
      %s22 = ssub.s32 %s14, %s21
      %p23 = scmp.eq.s32.totalorder %s22, 0
      %s25 = sadd.s32 %s24, 1
      %s26 = scalar_select %p23, %s24, %s25
      %p29 = pneg %p23
      %p30 = scmp.eq.s32.totalorder %s14, 1
      %p31 = por %p29, %p30
      %p32 = scmp.ne.s32.totalorder %s24, %s27
      %p33 = scmp.eq.s32.totalorder %s14, 0
      %p34 = por %p32, %p33
      %p35 = scmp.ne.s32.totalorder %s24, %s27
      %p36 = scmp.eq.s32.totalorder %s19, 1
      %p37 = por %p35, %p36
      %p38 = scmp.ne.s32.totalorder %s27, %s28
      %p39 = scmp.eq.s32.totalorder %s19, 0
      %p40 = por %p38, %p39
      %p41 = scmp.ne.s32.totalorder %s27, %s28
      %p42 = scmp.eq.s32.totalorder %s20, 1
      %p43 = por %p41, %p42
      %p45 = scmp.ne.s32.totalorder %s28, %s44
      %p46 = scmp.eq.s32.totalorder %s20, 0
      %p47 = por %p45, %p46
      %s49 = sadd.s32 %s48, 1
      %p52 = scmp.eq.s32.totalorder %s14, 1
      %p53 = scmp.ne.s32.totalorder %s48, %s50
      %p54 = scmp.eq.s32.totalorder %s14, 0
      %p55 = por %p53, %p54
      %p56 = scmp.ne.s32.totalorder %s48, %s50
      %p57 = scmp.eq.s32.totalorder %s19, 1
      %p58 = por %p56, %p57
      %p59 = scmp.ne.s32.totalorder %s50, %s51
      %p60 = scmp.eq.s32.totalorder %s19, 0
      %p61 = por %p59, %p60
      %p62 = scmp.ne.s32.totalorder %s50, %s51
      %p63 = scmp.eq.s32.totalorder %s20, 1
      %p64 = por %p62, %p63
      %p66 = scmp.ne.s32.totalorder %s51, %s65
      %p67 = scmp.eq.s32.totalorder %s20, 0
      %p68 = por %p66, %p67
      %s70 = sadd.s32 %s69, 1
      %p73 = scmp.eq.s32.totalorder %s14, 1
      %p74 = scmp.ne.s32.totalorder %s69, %s71
      %p75 = scmp.eq.s32.totalorder %s14, 0
      %p76 = por %p74, %p75
      %p77 = scmp.ne.s32.totalorder %s69, %s71
      %p78 = scmp.eq.s32.totalorder %s19, 1
      %p79 = por %p77, %p78
      %p80 = scmp.ne.s32.totalorder %s71, %s72
      %p81 = scmp.eq.s32.totalorder %s19, 0
      %p82 = por %p80, %p81
      %p83 = scmp.ne.s32.totalorder %s71, %s72
      %p84 = scmp.eq.s32.totalorder %s20, 1
      %p85 = por %p83, %p84
      %p87 = scmp.ne.s32.totalorder %s72, %s86
      %p88 = scmp.eq.s32.totalorder %s20, 0
      %p89 = por %p87, %p88
      %s90 = ssub.s32 %s14, %s21
      %p91 = scmp.eq.s32.totalorder %s90, 0
      %s93 = sadd.s32 %s92, 1
      %s94 = scalar_select %p91, %s92, %s93
      %p97 = pneg %p91
      %p98 = scmp.eq.s32.totalorder %s14, 1
      %p99 = por %p97, %p98
      %p100 = scmp.ne.s32.totalorder %s92, %s95
      %p101 = scmp.eq.s32.totalorder %s14, 0
      %p102 = por %p100, %p101
      %p103 = scmp.ne.s32.totalorder %s92, %s95
      %p104 = scmp.eq.s32.totalorder %s19, 1
      %p105 = por %p103, %p104
      %p106 = scmp.ne.s32.totalorder %s95, %s96
      %p107 = scmp.eq.s32.totalorder %s19, 0
      %p108 = por %p106, %p107
      %p109 = scmp.ne.s32.totalorder %s95, %s96
      %p110 = scmp.eq.s32.totalorder %s20, 1
      %p111 = por %p109, %p110
      %p113 = scmp.ne.s32.totalorder %s96, %s112
      %p114 = scmp.eq.s32.totalorder %s20, 0
      %p115 = por %p113, %p114
      %s116 = ssub.s32 %s14, %s21
      %p117 = scmp.eq.s32.totalorder %s116, 0
      %s119 = sadd.s32 %s118, 1
      %s120 = scalar_select %p117, %s118, %s119
      %p123 = pneg %p117
      %p124 = scmp.eq.s32.totalorder %s14, 1
      %p125 = por %p123, %p124
      %p126 = scmp.ne.s32.totalorder %s118, %s121
      %p127 = scmp.eq.s32.totalorder %s14, 0
      %p128 = por %p126, %p127
      %p129 = scmp.ne.s32.totalorder %s118, %s121
      %p130 = scmp.eq.s32.totalorder %s19, 1
      %p131 = por %p129, %p130
      %p132 = scmp.ne.s32.totalorder %s121, %s122
      %p133 = scmp.eq.s32.totalorder %s19, 0
      %p134 = por %p132, %p133
      %p135 = scmp.ne.s32.totalorder %s121, %s122
      %p136 = scmp.eq.s32.totalorder %s20, 1
      %p137 = por %p135, %p136
      %p139 = scmp.ne.s32.totalorder %s122, %s138
      %p140 = scmp.eq.s32.totalorder %s20, 0
      %p141 = por %p139, %p140
      %p142 = scmp.le.s32.totalorder 1, %s14
      %p143 = scmp.lt.s32.totalorder %s14, 3
      %p144 = pnand %p142, %p143
      %p145 = pneg %p144
      // Predicated region
      $region9: #{tpu_custom_call.1} parent=5 // pred_check
        _
      $region10: #{tpu_custom_call.1} parent=5 // pred_check_branch
        %147 = sbr.rel (%p144) target = $region12
      $region11: #{tpu_custom_call.1} parent=5 // pred_region
        %s148 = ssub.s32 %s14, 1
        // Predicated region
        $region13: #{tpu_custom_call.1} parent=11 // pred_check
          %p149 = pneg %p61
        $region14: #{tpu_custom_call.1} parent=11 // pred_check_branch
          %151 = sbr.rel (%p149) target = $region16
        $region15: #{tpu_custom_call.1} parent=11 // pred_region
          _
        $region16: #{tpu_custom_call.1} parent=11 // pred_fallthru
          _
        // Predicated region
        $region17: #{tpu_custom_call.1} parent=11 // pred_check
          %p152 = pneg %p82
        $region18: #{tpu_custom_call.1} parent=11 // pred_check_branch
          %154 = sbr.rel (%p152) target = $region20
        $region19: #{tpu_custom_call.1} parent=11 // pred_region
          _
        $region20: #{tpu_custom_call.1} parent=11 // pred_fallthru
          _
      $region12: #{tpu_custom_call.1} parent=5 // pred_fallthru
        _
      %p155 = scmp.lt.s32.totalorder %s14, 2
      // Predicated region
      $region21: #{tpu_custom_call.1} parent=5 // pred_check
        %p156 = pneg %p155
      $region22: #{tpu_custom_call.1} parent=5 // pred_check_branch
        %158 = sbr.rel (%p156) target = $region24
      $region23: #{tpu_custom_call.1} parent=5 // pred_region
        // Predicated region
        $region25: #{tpu_custom_call.1} parent=23 // pred_check
          %p159 = pneg %p34
        $region26: #{tpu_custom_call.1} parent=23 // pred_check_branch
          %161 = sbr.rel (%p159) target = $region28
        $region27: #{tpu_custom_call.1} parent=23 // pred_region
          %s162 = sand.u32 %s24, 1
          %s163 = scalar_lea.sflag [#allocation3], %s162
          %s164 = sand.u32 %s24, 1
          %s165 = smul.addr %s164, 32
          %s166 = scalar_lea.vmem [#allocation2], %s165
          %s167 = smul.u32 2, %s14
          %s169 = ssub.s32 512, 512
          %170 = vsyncadd %s163, %s169
          %s171 = smul.addr %s167, 2
          %s172 = smul.addr %s171, 128
          %s173 = scalar_lea.hbm %s0, %s172
          %s174 = sshll.u32 %s166, 4
          %s175 = int_to_ptr.vmem [resolvable:$true] %s174
          %180 = dma.hbm_to_vmem [thread:$0]  %s173, 512, %s175, %s163, 256, 256, 16
        $region28: #{tpu_custom_call.1} parent=23 // pred_fallthru
          _
      $region24: #{tpu_custom_call.1} parent=5 // pred_fallthru
        _
      %p181 = scmp.le.s32.totalorder 1, %s14
      %p182 = scmp.lt.s32.totalorder %s14, 3
      %p183 = pnand %p181, %p182
      %p184 = pneg %p183
      // Predicated region
      $region29: #{tpu_custom_call.1} parent=5 // pred_check
        _
      $region30: #{tpu_custom_call.1} parent=5 // pred_check_branch
        %186 = sbr.rel (%p183) target = $region32
      $region31: #{tpu_custom_call.1} parent=5 // pred_region
        %s187 = ssub.s32 %s14, 1
        %s188 = sand.u32 %s27, 1
        %s189 = scalar_lea.sflag [#allocation3], %s188
        %s190 = sand.u32 %s27, 1
        %s191 = smul.addr %s190, 32
        %s192 = scalar_lea.vmem [#allocation2], %s191
        // Predicated region
        $region33: #{tpu_custom_call.1} parent=31 // pred_check
          %p193 = pneg %p40
        $region34: #{tpu_custom_call.1} parent=31 // pred_check_branch
          %195 = sbr.rel (%p193) target = $region36
        $region35: #{tpu_custom_call.1} parent=31 // pred_region
          %196 = dma.done %s189, 512
        $region36: #{tpu_custom_call.1} parent=31 // pred_fallthru
          _
        %s197 = sand.u32 %s27, 1
        %s198 = scalar_lea.sflag [#allocation3], %s197
        %s199 = sand.u32 %s27, 1
        %s200 = smul.addr %s199, 32
        %s201 = scalar_lea.vmem [#allocation2], %s200
        %p202 = pneg %p40
        %p203 = pneg %p37
        %p204 = pneg %p61
        %p205 = pneg %p58
        %p206 = pneg %p82
        %p207 = pneg %p79
        %p208 = pneg %p108
        %p209 = pneg %p105
        %p210 = scmp.lt.s32.totalorder %s19, 1
        %s211 = scalar_select %p210, %s19, 1
        %s212 = smul.addr %s211, 2
        %s213 = smul.addr %s212, 8
        %s214 = scalar_lea.vmem %s3, %s213
        %p215 = pneg %p134
        %p216 = pneg %p131
        %p217 = scmp.lt.s32.totalorder %s19, 1
        %s218 = scalar_select %p217, %s19, 1
        %s219 = smul.addr %s218, 2
        %s220 = smul.addr %s219, 8
        %s221 = scalar_lea.vmem %s4, %s220
        %s222 = smul.u32 2, %s19
        %p223 = scmp.lt.s32.totalorder %s19, 1
        %s224 = scalar_select %p223, %s19, 1
        %s225 = smul.addr %s224, 2
        %s226 = smul.addr %s225, 8
        %s227 = scalar_lea.vmem %s3, %s226
        %p228 = scmp.lt.s32.totalorder %s19, 1
        %s229 = scalar_select %p228, %s19, 1
        %s230 = smul.addr %s229, 2
        %s231 = smul.addr %s230, 8
        %s232 = scalar_lea.vmem %s4, %s231
        %v233 = vld [vmem:[%s192] sm:$0xff]
        %v234 = vld [vmem:[%s192 + $0x8] sm:$0xff]
        %v235 = vld [vmem:[%s192 + $0x10] sm:$0xff]
        %v236 = vld [vmem:[%s192 + $0x18] sm:$0xff]
        %v237 = vld [vmem:[%s1] sm:$0xff]
        %v238 = vld [vmem:[%s2] sm:$0xff]
        %v239 = vld [vmem:[%s2 + $0x8] sm:$0xff]
        %v240 = vlaneseq
        %v241 = vand.u32 %v240, 127
        %v242 = vadd.s32 %v241, 128
        %243 = vrot.lane.b32.xlu0 %v233, 1
        %v244 = vpop.permute.xlu0 %243
        %245 = vrot.lane.b32.xlu0 %v235, 1
        %v246 = vpop.permute.xlu0 %245
        %247 = vrot.lane.b32.xlu0 %v234, 1
        %v248 = vpop.permute.xlu0 %247
        %249 = vrot.lane.b32.xlu0 %v236, 1
        %v250 = vpop.permute.xlu0 %249
        %vm251 = vcmp.lt.s32.totalorder %v241, 1
        %v252 = vsel %vm251, %v244, %v248
        %v253 = vsel %vm251, %v246, %v250
        %v254 = vsel %vm251, %v248, %v244
        %v255 = vsel %vm251, %v250, %v246
        %vm256 = vcmp.ge.s32.totalorder %v241, 1
        %vm257 = vcmp.ge.s32.totalorder %v242, 1
        %v258 = vsel %vm256, 1, 0
        %v259 = vsel %vm257, 1, 0
        %vm260 = vcmp.eq.s32.totalorder %v258, 1
        %vm261 = vcmp.eq.s32.totalorder %v259, 1
        %v262 = vsel %vm260, %v254, 0.0
        %v263 = vsel %vm261, %v252, 0.0
        %v264 = vsel %vm260, %v255, 0.0
        %v265 = vsel %vm261, %v253, 0.0
        %267 = vset.pattern.permute.xlu0 0
        %268 = vperm.xlu0 %267, %v237
        %v269 = vpop.permute.xlu0 %268
        %v271 = vmul.f32 %v269, %v262
        %v272 = vmul.f32 %v269, %v263
        %v273 = vmul.f32 %v269, %v264
        %v274 = vmul.f32 %v269, %v265
        %275 = vset.pattern.permute.xlu0 1
        %276 = vperm.xlu0 %275, %v237
        %v277 = vpop.permute.xlu0 %276
        %v279 = vmul.f32 %v277, %v233
        %v280 = vmul.f32 %v277, %v234
        %v281 = vmul.f32 %v277, %v235
        %v282 = vmul.f32 %v277, %v236
        %v283 = vadd.f32 %v271, %v279
        %v284 = vadd.f32 %v272, %v280
        %v285 = vadd.f32 %v273, %v281
        %v286 = vadd.f32 %v274, %v282
        %287 = vrot.lane.b32.xlu0 %v233, 127
        %v288 = vpop.permute.xlu0 %287
        %289 = vrot.lane.b32.xlu0 %v235, 127
        %v290 = vpop.permute.xlu0 %289
        %291 = vrot.lane.b32.xlu0 %v234, 127
        %v292 = vpop.permute.xlu0 %291
        %293 = vrot.lane.b32.xlu0 %v236, 127
        %v294 = vpop.permute.xlu0 %293
        %vm295 = vcmp.lt.s32.totalorder %v241, 127
        %v296 = vsel %vm295, %v288, %v292
        %v297 = vsel %vm295, %v290, %v294
        %v298 = vsel %vm295, %v292, %v288
        %v299 = vsel %vm295, %v294, %v290
        %vm300 = vcmp.lt.s32.totalorder %v241, 255
        %vm301 = vcmp.lt.s32.totalorder %v242, 255
        %v302 = vsel %vm300, 1, 0
        %v303 = vsel %vm301, 1, 0
        %vm304 = vcmp.eq.s32.totalorder %v302, 1
        %vm305 = vcmp.eq.s32.totalorder %v303, 1
        %v306 = vsel %vm304, %v296, 0.0
        %v307 = vsel %vm305, %v298, 0.0
        %v308 = vsel %vm304, %v297, 0.0
        %v309 = vsel %vm305, %v299, 0.0
        %310 = vset.pattern.permute.xlu0 2
        %311 = vperm.xlu0 %310, %v237
        %v312 = vpop.permute.xlu0 %311
        %v314 = vmul.f32 %v312, %v306
        %v315 = vmul.f32 %v312, %v307
        %v316 = vmul.f32 %v312, %v308
        %v317 = vmul.f32 %v312, %v309
        %v318 = vadd.f32 %v283, %v314
        %v319 = vadd.f32 %v284, %v315
        %v320 = vadd.f32 %v285, %v316
        %v321 = vadd.f32 %v286, %v317
        %vm322 = vcmask 64512
        %v324 = vsel %vm322, %v238, 0
        %v327 = vsel %vm322, %v239, 0
        %329 = vmatprep.subr.mxu0 %v319
        %330 = vmatpush1.msra.mxu0 %v318
        %331 = vmatprep.subr.mxu0 0.0
        %332 = vmatpush1.msra.mxu0 0.0
        %333 = vmatprep.subr.mxu0 0.0
        %334 = vmatpush1.msra.mxu0 0.0
        %335 = vmatprep.subr.mxu0 0.0
        %336 = vmatpush1.msra.mxu0 0.0
        %337 = vmatprep.subr.mxu0 0.0
        %338 = vmatpush1.msra.mxu0 0.0
        %339 = vmatprep.subr.mxu0 0.0
        %340 = vmatpush1.msra.mxu0 0.0
        %341 = vmatprep.subr.mxu0 0.0
        %342 = vmatpush1.msra.mxu0 0.0
        %343 = vmatprep.subr.mxu0 0.0
        %344 = vmatpush1.msra.mxu0 0.0
        %345 = vmatprep.subr.mxu0 0.0
        %346 = vmatpush1.msra.mxu0 0.0
        %347 = vmatprep.subr.mxu0 0.0
        %348 = vmatpush1.msra.mxu0 0.0
        %349 = vmatprep.subr.mxu0 0.0
        %350 = vmatpush1.msra.mxu0 0.0
        %351 = vmatprep.subr.mxu0 0.0
        %352 = vmatpush1.msra.mxu0 0.0
        %353 = vmatprep.subr.mxu0 0.0
        %354 = vmatpush1.msra.mxu0 0.0
        %355 = vmatprep.subr.mxu0 0.0
        %356 = vmatpush1.msra.mxu0 0.0
        %357 = vmatprep.subr.mxu0 0.0
        %358 = vmatpush1.msra.mxu0 0.0
        %359 = vmatprep.subr.mxu0 0.0
        %360 = vmatpush1.msra.mxu0 0.0
        %361 = vmatprep.subr.mxu0 0.0
        %362 = vmatpush1.msra.mxu0 0.0
        %363 = vmatprep.subr.mxu0 0.0
        %364 = vmatpush1.msra.mxu0 0.0
        %365 = vmatprep.subr.mxu0 0.0
        %366 = vmatpush1.msra.mxu0 0.0
        %367 = vmatprep.subr.mxu0 0.0
        %368 = vmatpush1.msra.mxu0 0.0
        %369 = vmatprep.subr.mxu0 0.0
        %370 = vmatpush1.msra.mxu0 0.0
        %371 = vmatprep.subr.mxu0 0.0
        %372 = vmatpush1.msra.mxu0 0.0
        %373 = vmatprep.subr.mxu0 0.0
        %374 = vmatpush1.msra.mxu0 0.0
        %375 = vmatprep.subr.mxu0 0.0
        %376 = vmatpush1.msra.mxu0 0.0
        %377 = vmatprep.subr.mxu0 0.0
        %378 = vmatpush1.msra.mxu0 0.0
        %379 = vmatprep.subr.mxu0 0.0
        %380 = vmatpush1.msra.mxu0 0.0
        %381 = vmatprep.subr.mxu0 0.0
        %382 = vmatpush1.msra.mxu0 0.0
        %383 = vmatprep.subr.mxu0 0.0
        %384 = vmatpush1.msra.mxu0 0.0
        %385 = vmatprep.subr.mxu0 0.0
        %386 = vmatpush1.msra.mxu0 0.0
        %387 = vmatprep.subr.mxu0 0.0
        %388 = vmatpush1.msra.mxu0 0.0
        %389 = vmatprep.subr.mxu0 0.0
        %390 = vmatpush1.msra.mxu0 0.0
        %391 = vmatprep.subr.mxu0 0.0
        %392 = vmatpush1.msra.mxu0 0.0
        %393 = vmatprep.mubr.f32.mxu0 0.0
        %394 = vmatmul.mubr.f32.gmra.mrb[0].mxu0 %v324
        %v395 = vpop.f32.mrb[0].mxu0
        %v396 = vadd.f32 0.0, %v395
        %v397 = vpop.f32.mrb[0].mxu0
        %v398 = vadd.f32 0.0, %v397
        %399 = vmatprep.mubr.f32.mxu0 0.0
        %400 = vmatmul.mubr.f32.gmra.mrb[0].mxu0 %v327
        %v401 = vpop.f32.mrb[0].mxu0
        %v402 = vadd.f32 0.0, %v401
        %v403 = vpop.f32.mrb[0].mxu0
        %v404 = vadd.f32 0.0, %v403
        %405 = vdwg.mxu0
        %406 = vmatprep.subr.mxu0 %v321
        %407 = vmatpush1.msra.mxu0 %v320
        %408 = vmatprep.subr.mxu0 0.0
        %409 = vmatpush1.msra.mxu0 0.0
        %410 = vmatprep.subr.mxu0 0.0
        %411 = vmatpush1.msra.mxu0 0.0
        %412 = vmatprep.subr.mxu0 0.0
        %413 = vmatpush1.msra.mxu0 0.0
        %414 = vmatprep.subr.mxu0 0.0
        %415 = vmatpush1.msra.mxu0 0.0
        %416 = vmatprep.subr.mxu0 0.0
        %417 = vmatpush1.msra.mxu0 0.0
        %418 = vmatprep.subr.mxu0 0.0
        %419 = vmatpush1.msra.mxu0 0.0
        %420 = vmatprep.subr.mxu0 0.0
        %421 = vmatpush1.msra.mxu0 0.0
        %422 = vmatprep.subr.mxu0 0.0
        %423 = vmatpush1.msra.mxu0 0.0
        %424 = vmatprep.subr.mxu0 0.0
        %425 = vmatpush1.msra.mxu0 0.0
        %426 = vmatprep.subr.mxu0 0.0
        %427 = vmatpush1.msra.mxu0 0.0
        %428 = vmatprep.subr.mxu0 0.0
        %429 = vmatpush1.msra.mxu0 0.0
        %430 = vmatprep.subr.mxu0 0.0
        %431 = vmatpush1.msra.mxu0 0.0
        %432 = vmatprep.subr.mxu0 0.0
        %433 = vmatpush1.msra.mxu0 0.0
        %434 = vmatprep.subr.mxu0 0.0
        %435 = vmatpush1.msra.mxu0 0.0
        %436 = vmatprep.subr.mxu0 0.0
        %437 = vmatpush1.msra.mxu0 0.0
        %438 = vmatprep.subr.mxu0 0.0
        %439 = vmatpush1.msra.mxu0 0.0
        %440 = vmatprep.subr.mxu0 0.0
        %441 = vmatpush1.msra.mxu0 0.0
        %442 = vmatprep.subr.mxu0 0.0
        %443 = vmatpush1.msra.mxu0 0.0
        %444 = vmatprep.subr.mxu0 0.0
        %445 = vmatpush1.msra.mxu0 0.0
        %446 = vmatprep.subr.mxu0 0.0
        %447 = vmatpush1.msra.mxu0 0.0
        %448 = vmatprep.subr.mxu0 0.0
        %449 = vmatpush1.msra.mxu0 0.0
        %450 = vmatprep.subr.mxu0 0.0
        %451 = vmatpush1.msra.mxu0 0.0
        %452 = vmatprep.subr.mxu0 0.0
        %453 = vmatpush1.msra.mxu0 0.0
        %454 = vmatprep.subr.mxu0 0.0
        %455 = vmatpush1.msra.mxu0 0.0
        %456 = vmatprep.subr.mxu0 0.0
        %457 = vmatpush1.msra.mxu0 0.0
        %458 = vmatprep.subr.mxu0 0.0
        %459 = vmatpush1.msra.mxu0 0.0
        %460 = vmatprep.subr.mxu0 0.0
        %461 = vmatpush1.msra.mxu0 0.0
        %462 = vmatprep.subr.mxu0 0.0
        %463 = vmatpush1.msra.mxu0 0.0
        %464 = vmatprep.subr.mxu0 0.0
        %465 = vmatpush1.msra.mxu0 0.0
        %466 = vmatprep.subr.mxu0 0.0
        %467 = vmatpush1.msra.mxu0 0.0
        %468 = vmatprep.subr.mxu0 0.0
        %469 = vmatpush1.msra.mxu0 0.0
        %470 = vmatprep.mubr.f32.mxu0 0.0
        %471 = vmatmul.mubr.f32.gmra.mrb[0].mxu0 %v324
        %v472 = vpop.f32.mrb[0].mxu0
        %v473 = vadd.f32 0.0, %v472
        %v474 = vpop.f32.mrb[0].mxu0
        %v475 = vadd.f32 0.0, %v474
        %476 = vmatprep.mubr.f32.mxu0 0.0
        %477 = vmatmul.mubr.f32.gmra.mrb[0].mxu0 %v327
        %v478 = vpop.f32.mrb[0].mxu0
        %v479 = vadd.f32 0.0, %v478
        %v480 = vpop.f32.mrb[0].mxu0
        %v481 = vadd.f32 0.0, %v480
        %482 = vdwg.mxu0
        %v483 = vadd.f32 %v396, %v398
        %484 = vadd.xlane.f32.xlu0 %v483
        %v485 = vpop.xlane.xlu0 %484
        %v486 = vadd.f32 %v402, %v404
        %487 = vadd.xlane.f32.xlu0 %v486
        %v488 = vpop.xlane.xlu0 %487
        %v489 = vmul.f32 %v396, %v396
        %v490 = vmul.f32 %v398, %v398
        %v491 = vmul.f32 %v402, %v402
        %v492 = vmul.f32 %v404, %v404
        %v493 = vadd.f32 %v489, %v490
        %494 = vadd.xlane.f32.xlu0 %v493
        %v495 = vpop.xlane.xlu0 %494
        %v496 = vadd.f32 %v491, %v492
        %497 = vadd.xlane.f32.xlu0 %v496
        %v498 = vpop.xlane.xlu0 %497
        %v499 = vadd.f32 %v473, %v475
        %500 = vadd.xlane.f32.xlu0 %v499
        %v501 = vpop.xlane.xlu0 %500
        %v502 = vadd.f32 %v479, %v481
        %503 = vadd.xlane.f32.xlu0 %v502
        %v504 = vpop.xlane.xlu0 %503
        %v505 = vmul.f32 %v473, %v473
        %v506 = vmul.f32 %v475, %v475
        %v507 = vmul.f32 %v479, %v479
        %v508 = vmul.f32 %v481, %v481
        %v509 = vadd.f32 %v505, %v506
        %510 = vadd.xlane.f32.xlu0 %v509
        %v511 = vpop.xlane.xlu0 %510
        %v512 = vadd.f32 %v507, %v508
        %513 = vadd.xlane.f32.xlu0 %v512
        %v514 = vpop.xlane.xlu0 %513
        %v515 = vadd.f32 %v485, %v501
        %v516 = vadd.f32 %v488, %v504
        %v517 = vadd.f32 %v495, %v511
        %v518 = vadd.f32 %v498, %v514
        %vm519 = vcmask 7168
        %520 = vst.msk [vmem:[%s227] sm:$0xff] %vm519, %v515
        %521 = vst.msk [vmem:[%s227 + $0x8] sm:$0xff] %vm519, %v516
        %522 = vst.msk [vmem:[%s232] sm:$0xff] %vm519, %v517
        %523 = vst.msk [vmem:[%s232 + $0x8] sm:$0xff] %vm519, %v518
        %p524 = scmp.lt.s32.totalorder %s19, 1
        %s525 = scalar_select %p524, %s19, 1
        %s526 = smul.addr %s525, 2
        %s527 = smul.addr %s526, 8
        %s528 = scalar_lea.vmem %s3, %s527
        %p529 = scmp.lt.s32.totalorder %s19, 1
        %s530 = scalar_select %p529, %s19, 1
        %s531 = smul.addr %s530, 2
        %s532 = smul.addr %s531, 8
        %s533 = scalar_lea.vmem %s4, %s532
        // Predicated region
        $region37: #{tpu_custom_call.1} parent=31 // pred_check
          %p534 = pneg %p105
        $region38: #{tpu_custom_call.1} parent=31 // pred_check_branch
          %536 = sbr.rel (%p534) target = $region40
        $region39: #{tpu_custom_call.1} parent=31 // pred_region
          _
        $region40: #{tpu_custom_call.1} parent=31 // pred_fallthru
          _
        // Predicated region
        $region41: #{tpu_custom_call.1} parent=31 // pred_check
          %p537 = pneg %p131
        $region42: #{tpu_custom_call.1} parent=31 // pred_check_branch
          %539 = sbr.rel (%p537) target = $region44
        $region43: #{tpu_custom_call.1} parent=31 // pred_region
          _
        $region44: #{tpu_custom_call.1} parent=31 // pred_fallthru
          _
      $region32: #{tpu_custom_call.1} parent=5 // pred_fallthru
        _
      %p540 = scmp.le.s32.totalorder 2, %s14
      // Predicated region
      $region45: #{tpu_custom_call.1} parent=5 // pred_check
        %p541 = pneg %p540
      $region46: #{tpu_custom_call.1} parent=5 // pred_check_branch
        %543 = sbr.rel (%p541) target = $region48
      $region47: #{tpu_custom_call.1} parent=5 // pred_region
        %s544 = ssub.s32 %s14, 2
        // Predicated region
        $region49: #{tpu_custom_call.1} parent=47 // pred_check
          %p545 = pneg %p111
        $region50: #{tpu_custom_call.1} parent=47 // pred_check_branch
          %547 = sbr.rel (%p545) target = $region52
        $region51: #{tpu_custom_call.1} parent=47 // pred_region
          %p548 = scmp.lt.s32.totalorder %s20, 1
          %s549 = scalar_select %p548, %s20, 1
          %s550 = smul.addr %s549, 2
          %s551 = smul.addr %s550, 8
          %s552 = scalar_lea.vmem %s3, %s551
        $region52: #{tpu_custom_call.1} parent=47 // pred_fallthru
          _
        // Predicated region
        $region53: #{tpu_custom_call.1} parent=47 // pred_check
          %p553 = pneg %p137
        $region54: #{tpu_custom_call.1} parent=47 // pred_check_branch
          %555 = sbr.rel (%p553) target = $region56
        $region55: #{tpu_custom_call.1} parent=47 // pred_region
          %p556 = scmp.lt.s32.totalorder %s20, 1
          %s557 = scalar_select %p556, %s20, 1
          %s558 = smul.addr %s557, 2
          %s559 = smul.addr %s558, 8
          %s560 = scalar_lea.vmem %s4, %s559
        $region56: #{tpu_custom_call.1} parent=47 // pred_fallthru
          _
      $region48: #{tpu_custom_call.1} parent=5 // pred_fallthru
        _
    $region6: #{tpu_custom_call.1} parent=1 // loop_footer
      %s18 = sadd.s32 1, %s14
    $region7: #{tpu_custom_call.1} parent=1 // loop_footer_branch
      %13 = sbr.rel target = $region3
    $region8: #{tpu_custom_call.1} parent=1 // loop_exit
      _
    %561 = vsyncpa [#allocation3], 1
    %s562 = scalar_lea.sflag [#allocation3], 1
    %563 = vsyncpa %s562, 1

</llo_original>
